<compile_context>
chip_gen: v7x
topology: tpu7x:2x2x1
jax: 0.10.0
libtpu: 0.0.40
codegen_flags: <defaults>
</compile_context>

<pallas_src>
from typing import NamedTuple

import jax
import jax.numpy as jnp
from jax.experimental import pallas as pl
from jax.experimental.pallas import tpu as pltpu

_LANE = 128          # lane-dense last dim
_MAX_TM = 512        # rows per block (safe for v5e 16 MiB scoped VMEM too)


def _init_posterior_kernel(loc_ref, low_ref, high_ref):
    x = loc_ref[...]
    half = jnp.asarray(0.5, dtype=x.dtype)
    low_ref[...] = x - half
    high_ref[...] = x + half


class UniformParams(NamedTuple):
    """JAX stand-in for torch.distributions.Uniform(low, high)."""
    low: jnp.ndarray
    high: jnp.ndarray

    def sample(self, key):
        u = jax.random.uniform(key, self.low.shape, dtype=self.low.dtype)
        return u * (self.high - self.low) + self.low

    def log_prob(self, value):
        inside = jnp.logical_and(value >= self.low, value <= self.high)
        lp = -jnp.log(self.high - self.low)
        return jnp.where(inside, lp, -jnp.inf)


@jax.jit
def _bounds(loc: jnp.ndarray):
    orig_shape = loc.shape
    total = loc.size

    # Lane-dense slab: rows x 128, rows padded up to a multiple of TM (and 8).
    rows = -(-total // _LANE)
    rows = ((rows + 7) // 8) * 8
    tm = min(_MAX_TM, rows)
    rows_pad = ((rows + tm - 1) // tm) * tm
    padded_total = rows_pad * _LANE

    flat = loc.reshape(-1)
    if padded_total != total:
        flat = jnp.pad(flat, (0, padded_total - total))
    slab = flat.reshape(rows_pad, _LANE)

    grid = (rows_pad // tm,)
    blk = pl.BlockSpec((tm, _LANE), lambda i: (i, 0))

    low2d, high2d = pl.pallas_call(
        _init_posterior_kernel,
        out_shape=(
            jax.ShapeDtypeStruct(slab.shape, slab.dtype),
            jax.ShapeDtypeStruct(slab.shape, slab.dtype),
        ),
        grid=grid,
        in_specs=[blk],
        out_specs=(blk, blk),
        input_output_aliases={0: 0},  # low reuses the (padded) loc buffer
        compiler_params=pltpu.CompilerParams(
            dimension_semantics=("parallel",)),
    )(slab)

    low = low2d.reshape(-1)[:total].reshape(orig_shape)
    high = high2d.reshape(-1)[:total].reshape(orig_shape)
    return low, high


def init_posterior(loc: jnp.ndarray) -> UniformParams:
    """Pallas implementation of InitPosterior.forward(loc).

    Returns the parameters (low, high) of Uniform(loc - 0.5, loc + 0.5),
    with the elementwise bound computation done inside a Pallas kernel.
    """
    low, high = _bounds(loc)
    return UniformParams(low=low, high=high)


if __name__ == "__main__":
    key = jax.random.PRNGKey(0)
    # Small NCHW input consistent with an image-codec "I-frame" posterior.
    B, C, H, W = 2, 4, 16, 16
    loc = jax.random.normal(key, (B, C, H, W), dtype=jnp.float32)

    dist = init_posterior(loc)
    jax.block_until_ready(dist.low)
    jax.block_until_ready(dist.high)

    # Correctness check against the reference semantics.
    assert jnp.allclose(dist.low, loc - 0.5, atol=1e-6)
    assert jnp.allclose(dist.high, loc + 0.5, atol=1e-6)
    assert dist.low.shape == (B, C, H, W)
    assert dist.high.shape == (B, C, H, W)

    # Sanity-check the distribution helpers (log_prob of Uniform width 1 is 0).
    lp = dist.log_prob(loc)
    assert jnp.allclose(lp, jnp.zeros_like(lp), atol=1e-6)

    print("KERNEL_OK")
</pallas_src>

<mosaic_0001>
module attributes {stable_mosaic.version = 11 : i64} {
  func.func @_init_posterior_kernel(%arg0: i32, %arg1: memref<16x128xf32, #tpu.memory_space<vmem>>, %arg2: memref<16x128xf32, #tpu.memory_space<vmem>>, %arg3: memref<16x128xf32, #tpu.memory_space<vmem>>) attributes {dimension_semantics = [#tpu.dimension_semantics<parallel>], iteration_bounds = array<i64: 1>, scalar_prefetch = 0 : i64, scratch_operands = 0 : i64, tpu.core_type = #tpu.core_type<tc>, window_params = [{transform_indices = @transform_0, window_bounds = array<i64: 16, 128>}, {transform_indices = @transform_1, window_bounds = array<i64: 16, 128>}, {transform_indices = @transform_2, window_bounds = array<i64: 16, 128>}]} {
    %c0 = arith.constant 0 : index
    %c0_0 = arith.constant 0 : index
    %0 = vector.load %arg1[%c0, %c0_0] : memref<16x128xf32, #tpu.memory_space<vmem>>, vector<16x128xf32>
    %cst = arith.constant 5.000000e-01 : f32
    %1 = vector.broadcast %cst : f32 to vector<16x128xf32>
    %2 = arith.subf %0, %1 : vector<16x128xf32>
    %c0_1 = arith.constant 0 : index
    %c0_2 = arith.constant 0 : index
    %3 = vector.load %arg2[%c0_1, %c0_2] : memref<16x128xf32, #tpu.memory_space<vmem>>, vector<16x128xf32>
    tpu.vector_store %arg2[%c0_1, %c0_2], %2 {strides = array<i32>} : memref<16x128xf32, #tpu.memory_space<vmem>>, vector<16x128xf32>,
    %cst_3 = arith.constant 5.000000e-01 : f32
    %4 = vector.broadcast %cst_3 : f32 to vector<16x128xf32>
    %5 = arith.addf %0, %4 : vector<16x128xf32>
    %c0_4 = arith.constant 0 : index
    %c0_5 = arith.constant 0 : index
    %6 = vector.load %arg3[%c0_4, %c0_5] : memref<16x128xf32, #tpu.memory_space<vmem>>, vector<16x128xf32>
    tpu.vector_store %arg3[%c0_4, %c0_5], %5 {strides = array<i32>} : memref<16x128xf32, #tpu.memory_space<vmem>>, vector<16x128xf32>,
    return
  }
  func.func @transform_0(%arg0: i32) -> (i32, i32) {
    %c0_i32 = arith.constant 0 : i32
    %c0_i32_0 = arith.constant 0 : i32
    return %arg0, %c0_i32 : i32, i32
  }
  func.func @transform_1(%arg0: i32) -> (i32, i32) {
    %c0_i32 = arith.constant 0 : i32
    %c0_i32_0 = arith.constant 0 : i32
    return %arg0, %c0_i32 : i32, i32
  }
  func.func @transform_2(%arg0: i32) -> (i32, i32) {
    %c0_i32 = arith.constant 0 : i32
    %c0_i32_0 = arith.constant 0 : i32
    return %arg0, %c0_i32 : i32, i32
  }
}

</mosaic_0001>

<llo_original>
// kernel: _bounds.1
$region0: #{_bounds.1}
  #allocation0 [shape = 'u32[]', space=smem, size = 0x4, offset = 0x4, fixed_abs, tag = 'smem constant byte address 0x4 - core index']
  #allocation1 [shape = 'u32[144,128]{1,0:T(1,128)}', space=vmem, size = 0x12000, scoped, tag = 'internal scratch']
  %s0 = inlined_call_operand.vmem [shape: f32[16,128], index: 0, kind: input, shape index: {}, may-alias: {0,1}]
  %s1 = inlined_call_operand.vmem [shape: f32[16,128], index: 1, kind: output, shape index: {0}, may-alias: {0,1}]
  %s2 = inlined_call_operand.vmem [shape: f32[16,128], index: 2, kind: output, shape index: {1}]
  %3 = xla_tuple %s1, %s2
  %s4 = sld [smem:[#allocation0]]
  $region22: #{_bounds.1} parent=0
    _
  %s6 = ssub.s32 1, %s4
  %s7 = scalar_select 0, %s6, %s4
  // Predicated region
  $region2: #{_bounds.1} parent=0 // pred_check
    _
  $region3: #{_bounds.1} parent=0 // pred_check_branch
    %9 = sbr.rel (0) target = $region5
  $region4: #{_bounds.1} parent=0 // pred_region
    _
  $region5: #{_bounds.1} parent=0 // pred_fallthru
    _
  %v10 = vld [vmem:[%s0] sm:$0xff]
  %v11 = vld [vmem:[%s0 + $0x8] sm:$0xff]
  %v12 = vsub.f32 %v10, 0.5
  %v13 = vsub.f32 %v11, 0.5
  %14 = vst [vmem:[%s1] sm:$0xff] %v12
  %15 = vst [vmem:[%s1 + $0x8] sm:$0xff] %v13
  %v16 = vadd.f32 %v10, 0.5
  %v17 = vadd.f32 %v11, 0.5
  %18 = vst [vmem:[%s2] sm:$0xff] %v16
  %19 = vst [vmem:[%s2 + $0x8] sm:$0xff] %v17
  // Predicated region
  $region6: #{_bounds.1} parent=0 // pred_check
    _
  $region7: #{_bounds.1} parent=0 // pred_check_branch
    %21 = sbr.rel (0) target = $region9
  $region8: #{_bounds.1} parent=0 // pred_region
    _
  $region9: #{_bounds.1} parent=0 // pred_fallthru
    _
  // Predicated region
  $region10: #{_bounds.1} parent=0 // pred_check
    _
  $region11: #{_bounds.1} parent=0 // pred_check_branch
    %23 = sbr.rel (0) target = $region13
  $region12: #{_bounds.1} parent=0 // pred_region
    _
  $region13: #{_bounds.1} parent=0 // pred_fallthru
    _
  // Predicated region
  $region14: #{_bounds.1} parent=0 // pred_check
    _
  $region15: #{_bounds.1} parent=0 // pred_check_branch
    %25 = sbr.rel (0) target = $region17
  $region16: #{_bounds.1} parent=0 // pred_region
    _
  $region17: #{_bounds.1} parent=0 // pred_fallthru
    _
  // Predicated region
  $region18: #{_bounds.1} parent=0 // pred_check
    _
  $region19: #{_bounds.1} parent=0 // pred_check_branch
    %27 = sbr.rel (0) target = $region21
  $region20: #{_bounds.1} parent=0 // pred_region
    _
  $region21: #{_bounds.1} parent=0 // pred_fallthru
    _

</llo_original>
